<compile_context>
chip_gen: v7x
topology: tpu7x:2x2x1
jax: 0.10.0
libtpu: 0.0.40
codegen_flags: <defaults>
</compile_context>

<pallas_src>
import math

import jax
import jax.numpy as jnp
from jax.experimental import pallas as pl
from jax.experimental.pallas import tpu as pltpu


_GELU_C = math.sqrt(2.0 / math.pi)


def _gelu_new(x):
    # Identical formula to the PyTorch gelu_new, but x*x*x instead of pow(x, 3.0)
    # (float-exponent pow may lower through exp/log and misbehave for x < 0).
    return 0.5 * x * (1.0 + jnp.tanh(_GELU_C * (x + 0.044715 * (x * x * x))))


def glu_ffd_kernel(x_ref, w01_ref, wo_ref, o_ref, acc_ref):
    # x_ref  : (tm, d_model)      VMEM
    # w01_ref: (d_model, 2*tf)    VMEM  ([w0 tile j | w1 tile j])
    # wo_ref : (tf, d_model)      VMEM
    # o_ref  : (tm, d_model)      VMEM  (revisited across j)
    # acc_ref: (tm, d_model) f32  VMEM scratch accumulator
    j = pl.program_id(1)

    @pl.when(j == 0)
    def _():
        acc_ref[...] = jnp.zeros_like(acc_ref)

    tf = wo_ref.shape[0]
    x = x_ref[...]

    # Fused gate + linear projection: one wide MXU matmul, f32 accumulation.
    h01 = jnp.dot(x, w01_ref[...], preferred_element_type=jnp.float32)
    h0 = h01[:, :tf]
    h1 = h01[:, tf:]

    # f32 epilogue: gelu_new(gate) * linear.
    # TODO(synk): dropout omitted (module run in eval mode); training parity
    # would need pltpu.prng_seed / prng_random_bits here.
    h = _gelu_new(h0) * h1

    # Partial contraction over this d_ff tile, accumulated in f32.
    acc_ref[...] += jnp.dot(h.astype(wo_ref.dtype), wo_ref[...],
                            preferred_element_type=jnp.float32)

    @pl.when(j == pl.num_programs(1) - 1)
    def _():
        o_ref[...] = acc_ref[...].astype(o_ref.dtype)


def _pick_tm(m, target=256, align=8):
    """Largest aligned divisor of m that is <= target (or m itself)."""
    if m <= target:
        return m
    t = (target // align) * align
    while t >= align:
        if m % t == 0:
            return t
        t -= align
    return m


def _pick_tf(d_ff, target=512, align=128):
    """d_ff tile: multiple of 128 (lane-dense, keeps 2*tf % 128 == 0)."""
    if d_ff <= target:
        return d_ff
    t = (target // align) * align
    while t >= align:
        if d_ff % t == 0:
            return t
        t -= align
    return d_ff


def glu_ffd(x, w0, w1, wo):
    """x: (B, S, d_model); w0/w1: (d_model, d_ff); wo: (d_ff, d_model).

    Weights are pre-transposed relative to nn.Linear ((out, in) -> (in, out)).
    Pass bf16 tensors for the bf16 MXU path; accumulation is always f32.
    """
    B, S, d_model = x.shape
    d_ff = w0.shape[1]
    M = B * S
    x2d = x.reshape(M, d_model)

    tm = _pick_tm(M)
    tf = _pick_tf(d_ff)
    nm = M // tm
    nf = d_ff // tf

    # Fuse w0/w1 tile-wise: block j of width 2*tf holds [w0[:, j*tf:(j+1)*tf],
    # w1[:, j*tf:(j+1)*tf]] contiguously, so one BlockSpec covers both.
    w01 = jnp.concatenate(
        [w0.reshape(d_model, nf, tf), w1.reshape(d_model, nf, tf)], axis=2
    ).reshape(d_model, nf * 2 * tf)

    itemsize = jnp.dtype(x.dtype).itemsize
    cost = pl.CostEstimate(
        flops=6 * M * d_model * d_ff,            # 4*M*dm*dff (fused) + 2*M*dff*dm
        transcendentals=M * d_ff,                # one tanh per hidden element
        bytes_accessed=(x2d.size + w01.size + wo.size) * itemsize
        + M * d_model * itemsize,
    )

    out2d = pl.pallas_call(
        glu_ffd_kernel,
        out_shape=jax.ShapeDtypeStruct((M, d_model), x.dtype),
        grid_spec=pltpu.PrefetchScalarGridSpec(
            num_scalar_prefetch=0,
            grid=(nm, nf),
            in_specs=[
                pl.BlockSpec((tm, d_model), lambda i, j: (i, 0)),
                pl.BlockSpec((d_model, 2 * tf), lambda i, j: (0, j)),
                pl.BlockSpec((tf, d_model), lambda i, j: (j, 0)),
            ],
            out_specs=pl.BlockSpec((tm, d_model), lambda i, j: (i, 0)),
            scratch_shapes=[pltpu.VMEM((tm, d_model), jnp.float32)],
        ),
        compiler_params=pltpu.CompilerParams(
            dimension_semantics=("parallel", "arbitrary"),
            vmem_limit_bytes=48 * 1024 * 1024,   # headroom under v7x 64 MiB physical
        ),
        cost_estimate=cost,
    )(x2d, w01, wo)
    return out2d.reshape(B, S, d_model)


def glu_ffd_ref(x, w0, w1, wo):
    h0 = jnp.einsum("bsd,df->bsf", x, w0)
    h1 = jnp.einsum("bsd,df->bsf", x, w1)
    h = _gelu_new(h0) * h1
    return jnp.einsum("bsf,fd->bsd", h, wo)


if __name__ == "__main__":
    # cfg: d_model=32, d_ff=64, dropout=0.0 ; inputs: batch=2, seq=8
    B, S, d_model, d_ff = 2, 8, 32, 64

    key = jax.random.PRNGKey(0)
    kx, k0, k1, ko = jax.random.split(key, 4)

    x = jax.random.normal(kx, (B, S, d_model), dtype=jnp.float32)
    # nn.Linear weight is (out, in); store pre-transposed (in, out) for the kernel.
    w0 = (jax.random.normal(k0, (d_model, d_ff), dtype=jnp.float32)
          * (1.0 / math.sqrt(d_model)))
    w1 = (jax.random.normal(k1, (d_model, d_ff), dtype=jnp.float32)
          * (1.0 / math.sqrt(d_model)))
    wo = (jax.random.normal(ko, (d_ff, d_model), dtype=jnp.float32)
          * (1.0 / math.sqrt(d_ff)))

    out = glu_ffd(x, w0, w1, wo)
    out = jax.block_until_ready(out)

    ref = glu_ffd_ref(x, w0, w1, wo)
    assert out.shape == (B, S, d_model)
    assert jnp.allclose(out, ref, atol=1e-4, rtol=1e-4), "mismatch vs reference"

    print("KERNEL_OK")
</pallas_src>

<mosaic_0001>
module attributes {stable_mosaic.version = 11 : i64} {
  func.func @glu_ffd_kernel(%arg0: i32, %arg1: i32, %arg2: memref<16x32xf32, #tpu.memory_space<vmem>>, %arg3: memref<32x128xf32, #tpu.memory_space<vmem>>, %arg4: memref<64x32xf32, #tpu.memory_space<vmem>>, %arg5: memref<16x32xf32, #tpu.memory_space<vmem>>, %arg6: memref<16x32xf32, #tpu.memory_space<vmem>>) attributes {dimension_semantics = [#tpu.dimension_semantics<parallel>, #tpu.dimension_semantics<arbitrary>], iteration_bounds = array<i64: 1, 1>, scalar_prefetch = 0 : i64, scratch_operands = 1 : i64, tpu.core_type = #tpu.core_type<tc>, window_params = [{transform_indices = @transform_0, window_bounds = array<i64: 16, 32>}, {transform_indices = @transform_1, window_bounds = array<i64: 32, 128>}, {transform_indices = @transform_2, window_bounds = array<i64: 64, 32>}, {transform_indices = @transform_3, window_bounds = array<i64: 16, 32>}]} {
    %c0_i32 = arith.constant 0 : i32
    %0 = arith.cmpi eq, %arg1, %c0_i32 : i32
    %1 = arith.extui %0 : i1 to i32
    %c0_i32_0 = arith.constant 0 : i32
    %2 = arith.cmpi ne, %1, %c0_i32_0 : i32
    scf.if %2 {
      %cst_17 = arith.constant 0.000000e+00 : f32
      %30 = vector.broadcast %cst_17 : f32 to vector<16x32xf32>
      %c0_18 = arith.constant 0 : index
      %c0_19 = arith.constant 0 : index
      %31 = vector.load %arg6[%c0_18, %c0_19] : memref<16x32xf32, #tpu.memory_space<vmem>>, vector<16x32xf32>
      tpu.vector_store %arg6[%c0_18, %c0_19], %30 {strides = array<i32>} : memref<16x32xf32, #tpu.memory_space<vmem>>, vector<16x32xf32>,
    } else {
    }
    %c0 = arith.constant 0 : index
    %c0_1 = arith.constant 0 : index
    %3 = vector.load %arg2[%c0, %c0_1] : memref<16x32xf32, #tpu.memory_space<vmem>>, vector<16x32xf32>
    %c0_2 = arith.constant 0 : index
    %c0_3 = arith.constant 0 : index
    %4 = vector.load %arg3[%c0_2, %c0_3] : memref<32x128xf32, #tpu.memory_space<vmem>>, vector<32x128xf32>
    %cst = arith.constant dense<0.000000e+00> : vector<16x128xf32>
    %5 = tpu.matmul %3, %4, %cst {dimension_numbers = #tpu.dot_dimension_numbers<[1], [0], [0], [1], [0, 0, 1, 1], [], []>} : vector<16x32xf32>, vector<32x128xf32>, vector<16x128xf32> -> vector<16x128xf32>
    %6 = vector.extract_strided_slice %5 {offsets = [0, 0], sizes = [16, 64], strides = [1, 1]} : vector<16x128xf32> to vector<16x64xf32>
    %7 = vector.extract_strided_slice %5 {offsets = [0, 64], sizes = [16, 64], strides = [1, 1]} : vector<16x128xf32> to vector<16x64xf32>
    %cst_4 = arith.constant 5.000000e-01 : f32
    %8 = vector.broadcast %cst_4 : f32 to vector<16x64xf32>
    %9 = arith.mulf %8, %6 : vector<16x64xf32>
    %10 = arith.mulf %6, %6 : vector<16x64xf32>
    %11 = arith.mulf %10, %6 : vector<16x64xf32>
    %cst_5 = arith.constant 4.471500e-02 : f32
    %12 = vector.broadcast %cst_5 : f32 to vector<16x64xf32>
    %13 = arith.mulf %12, %11 : vector<16x64xf32>
    %14 = arith.addf %6, %13 : vector<16x64xf32>
    %cst_6 = arith.constant 0.797884583 : f32
    %15 = vector.broadcast %cst_6 : f32 to vector<16x64xf32>
    %16 = arith.mulf %15, %14 : vector<16x64xf32>
    %17 = math.tanh %16 : vector<16x64xf32>
    %cst_7 = arith.constant 1.000000e+00 : f32
    %18 = vector.broadcast %cst_7 : f32 to vector<16x64xf32>
    %19 = arith.addf %18, %17 : vector<16x64xf32>
    %20 = arith.mulf %9, %19 : vector<16x64xf32>
    %21 = arith.mulf %20, %7 : vector<16x64xf32>
    %c0_8 = arith.constant 0 : index
    %c0_9 = arith.constant 0 : index
    %22 = vector.load %arg6[%c0_8, %c0_9] : memref<16x32xf32, #tpu.memory_space<vmem>>, vector<16x32xf32>
    %c0_10 = arith.constant 0 : index
    %c0_11 = arith.constant 0 : index
    %23 = vector.load %arg4[%c0_10, %c0_11] : memref<64x32xf32, #tpu.memory_space<vmem>>, vector<64x32xf32>
    %cst_12 = arith.constant dense<0.000000e+00> : vector<16x32xf32>
    %24 = tpu.matmul %21, %23, %cst_12 {dimension_numbers = #tpu.dot_dimension_numbers<[1], [0], [0], [1], [0, 0, 1, 1], [], []>} : vector<16x64xf32>, vector<64x32xf32>, vector<16x32xf32> -> vector<16x32xf32>
    %25 = arith.addf %22, %24 : vector<16x32xf32>
    %c0_13 = arith.constant 0 : index
    %c0_14 = arith.constant 0 : index
    %26 = vector.load %arg6[%c0_13, %c0_14] : memref<16x32xf32, #tpu.memory_space<vmem>>, vector<16x32xf32>
    tpu.vector_store %arg6[%c0_13, %c0_14], %25 {strides = array<i32>} : memref<16x32xf32, #tpu.memory_space<vmem>>, vector<16x32xf32>,
    %c0_i32_15 = arith.constant 0 : i32
    %27 = arith.cmpi eq, %arg1, %c0_i32_15 : i32
    %28 = arith.extui %27 : i1 to i32
    %c0_i32_16 = arith.constant 0 : i32
    %29 = arith.cmpi ne, %28, %c0_i32_16 : i32
    scf.if %29 {
      %c0_17 = arith.constant 0 : index
      %c0_18 = arith.constant 0 : index
      %30 = vector.load %arg6[%c0_17, %c0_18] : memref<16x32xf32, #tpu.memory_space<vmem>>, vector<16x32xf32>
      %c0_19 = arith.constant 0 : index
      %c0_20 = arith.constant 0 : index
      %31 = vector.load %arg5[%c0_19, %c0_20] : memref<16x32xf32, #tpu.memory_space<vmem>>, vector<16x32xf32>
      tpu.vector_store %arg5[%c0_19, %c0_20], %30 {strides = array<i32>} : memref<16x32xf32, #tpu.memory_space<vmem>>, vector<16x32xf32>,
    } else {
    }
    return
  }
  func.func @transform_0(%arg0: i32, %arg1: i32) -> (i32, i32) {
    %c0_i32 = arith.constant 0 : i32
    %c0_i32_0 = arith.constant 0 : i32
    return %arg0, %c0_i32 : i32, i32
  }
  func.func @transform_1(%arg0: i32, %arg1: i32) -> (i32, i32) {
    %c0_i32 = arith.constant 0 : i32
    %c0_i32_0 = arith.constant 0 : i32
    return %c0_i32, %arg1 : i32, i32
  }
  func.func @transform_2(%arg0: i32, %arg1: i32) -> (i32, i32) {
    %c0_i32 = arith.constant 0 : i32
    %c0_i32_0 = arith.constant 0 : i32
    return %arg1, %c0_i32 : i32, i32
  }
  func.func @transform_3(%arg0: i32, %arg1: i32) -> (i32, i32) {
    %c0_i32 = arith.constant 0 : i32
    %c0_i32_0 = arith.constant 0 : i32
    return %arg0, %c0_i32 : i32, i32
  }
}

</mosaic_0001>

<llo_original>
// kernel: tpu_custom_call.1
$region0: #{tpu_custom_call.1}
  #allocation0 [shape = 'u32[]', space=smem, size = 0x4, offset = 0x4, fixed_abs, tag = 'smem constant byte address 0x4 - core index']
  #allocation1 [shape = 'u32[144,128]{1,0:T(1,128)}', space=vmem, size = 0x12000, scoped, tag = 'internal scratch']
  #allocation2 [shape = 'f32[16,32]{1,0:T(8,128)}', space=vmem, size = 0x2000, scoped, tag = 'scratch operand']
  %s0 = inlined_call_operand.vmem [shape: f32[16,32], index: 0, kind: input, shape index: {}]
  %s1 = inlined_call_operand.vmem [shape: f32[32,128], index: 1, kind: input, shape index: {}]
  %s2 = inlined_call_operand.vmem [shape: f32[64,32], index: 2, kind: input, shape index: {}]
  %s3 = inlined_call_operand.hbm [shape: f32[16,32], index: 3, kind: output, shape index: {}]
  %s4 = sld [smem:[#allocation0]]
  $region30: #{tpu_custom_call.1} parent=0
    _
  %s6 = ssub.s32 1, %s4
  %s7 = scalar_select 0, %s6, %s4
  $region1: #{tpu_custom_call.1} parent=0
    #allocation3 [shape = 'u8[8192]{0}', space=vmem, size = 0x2000, scoped, tag = 'output window, operand 0, single buffered']
    #allocation4 [shape = 's32[1]{0}', space=sflag, size = 0x4, scoped, tag = 'scoped memory for tpu_custom_call.1']
    %8 = vsyncpa [#allocation4], 0
    // Predicated region
    $region2: #{tpu_custom_call.1} parent=1 // pred_check
      _
    $region3: #{tpu_custom_call.1} parent=1 // pred_check_branch
      %10 = sbr.rel (0) target = $region5
    $region4: #{tpu_custom_call.1} parent=1 // pred_region
      _
    $region5: #{tpu_custom_call.1} parent=1 // pred_fallthru
      _
    // Predicated region
    $region6: #{tpu_custom_call.1} parent=1 // pred_check
      _
    $region7: #{tpu_custom_call.1} parent=1 // pred_check_branch
      %12 = sbr.rel (0) target = $region9
    $region8: #{tpu_custom_call.1} parent=1 // pred_region
      _
    $region9: #{tpu_custom_call.1} parent=1 // pred_fallthru
      _
    // Predicated region
    $region10: #{tpu_custom_call.1} parent=1 // pred_check
      _
    $region11: #{tpu_custom_call.1} parent=1 // pred_check_branch
      %14 = sbr.rel (0) target = $region13
    $region12: #{tpu_custom_call.1} parent=1 // pred_region
      _
    $region13: #{tpu_custom_call.1} parent=1 // pred_fallthru
      _
    %p15 = scmp.eq.s32.totalorder 0, 0
    // Predicated region
    $region14: #{tpu_custom_call.1} parent=1 // pred_check
      %p16 = pneg %p15
    $region15: #{tpu_custom_call.1} parent=1 // pred_check_branch
      %18 = sbr.rel (%p16) target = $region17
    $region16: #{tpu_custom_call.1} parent=1 // pred_region
      %vm19 = vcmask 261120
      %20 = vst.msk [vmem:[#allocation2] sm:$0xff] %vm19, 0.0
      %21 = vst.msk [vmem:[#allocation2 + $0x8] sm:$0xff] %vm19, 0.0
    $region17: #{tpu_custom_call.1} parent=1 // pred_fallthru
      _
    %v22 = vld [vmem:[%s0] sm:$0xff]
    %v23 = vld [vmem:[%s0 + $0x8] sm:$0xff]
    %v24 = vld [vmem:[%s1] sm:$0xff]
    %v25 = vld [vmem:[%s1 + $0x8] sm:$0xff]
    %v26 = vld [vmem:[%s1 + $0x10] sm:$0xff]
    %v27 = vld [vmem:[%s1 + $0x18] sm:$0xff]
    %vm28 = vcmask 261120
    %v30 = vsel %vm28, %v22, 0
    %v33 = vsel %vm28, %v23, 0
    %35 = vmatprep.subr.mxu0 0.0
    %36 = vmatpush1.msra.mxu0 %v24
    %37 = vmatprep.subr.mxu0 0.0
    %38 = vmatpush1.msra.mxu0 %v25
    %39 = vmatprep.subr.mxu0 0.0
    %40 = vmatpush1.msra.mxu0 %v26
    %41 = vmatprep.subr.mxu0 0.0
    %42 = vmatpush1.msra.mxu0 %v27
    %43 = vmatprep.subr.mxu0 0.0
    %44 = vmatpush1.msra.mxu0 0.0
    %45 = vmatprep.subr.mxu0 0.0
    %46 = vmatpush1.msra.mxu0 0.0
    %47 = vmatprep.subr.mxu0 0.0
    %48 = vmatpush1.msra.mxu0 0.0
    %49 = vmatprep.subr.mxu0 0.0
    %50 = vmatpush1.msra.mxu0 0.0
    %51 = vmatprep.subr.mxu0 0.0
    %52 = vmatpush1.msra.mxu0 0.0
    %53 = vmatprep.subr.mxu0 0.0
    %54 = vmatpush1.msra.mxu0 0.0
    %55 = vmatprep.subr.mxu0 0.0
    %56 = vmatpush1.msra.mxu0 0.0
    %57 = vmatprep.subr.mxu0 0.0
    %58 = vmatpush1.msra.mxu0 0.0
    %59 = vmatprep.subr.mxu0 0.0
    %60 = vmatpush1.msra.mxu0 0.0
    %61 = vmatprep.subr.mxu0 0.0
    %62 = vmatpush1.msra.mxu0 0.0
    %63 = vmatprep.subr.mxu0 0.0
    %64 = vmatpush1.msra.mxu0 0.0
    %65 = vmatprep.subr.mxu0 0.0
    %66 = vmatpush1.msra.mxu0 0.0
    %67 = vmatprep.subr.mxu0 0.0
    %68 = vmatpush1.msra.mxu0 0.0
    %69 = vmatprep.subr.mxu0 0.0
    %70 = vmatpush1.msra.mxu0 0.0
    %71 = vmatprep.subr.mxu0 0.0
    %72 = vmatpush1.msra.mxu0 0.0
    %73 = vmatprep.subr.mxu0 0.0
    %74 = vmatpush1.msra.mxu0 0.0
    %75 = vmatprep.subr.mxu0 0.0
    %76 = vmatpush1.msra.mxu0 0.0
    %77 = vmatprep.subr.mxu0 0.0
    %78 = vmatpush1.msra.mxu0 0.0
    %79 = vmatprep.subr.mxu0 0.0
    %80 = vmatpush1.msra.mxu0 0.0
    %81 = vmatprep.subr.mxu0 0.0
    %82 = vmatpush1.msra.mxu0 0.0
    %83 = vmatprep.subr.mxu0 0.0
    %84 = vmatpush1.msra.mxu0 0.0
    %85 = vmatprep.subr.mxu0 0.0
    %86 = vmatpush1.msra.mxu0 0.0
    %87 = vmatprep.subr.mxu0 0.0
    %88 = vmatpush1.msra.mxu0 0.0
    %89 = vmatprep.subr.mxu0 0.0
    %90 = vmatpush1.msra.mxu0 0.0
    %91 = vmatprep.subr.mxu0 0.0
    %92 = vmatpush1.msra.mxu0 0.0
    %93 = vmatprep.subr.mxu0 0.0
    %94 = vmatpush1.msra.mxu0 0.0
    %95 = vmatprep.subr.mxu0 0.0
    %96 = vmatpush1.msra.mxu0 0.0
    %97 = vmatprep.subr.mxu0 0.0
    %98 = vmatpush1.msra.mxu0 0.0
    %99 = vmatprep.mubr.f32.mxu0 0.0
    %100 = vmatmul.mubr.f32.gmra.mrb[0].mxu0 %v30
    %v101 = vpop.f32.mrb[0].mxu0
    %v102 = vadd.f32 0.0, %v101
    %v103 = vpop.f32.mrb[0].mxu0
    %104 = vmatprep.mubr.f32.mxu0 0.0
    %105 = vmatmul.mubr.f32.gmra.mrb[0].mxu0 %v33
    %v106 = vpop.f32.mrb[0].mxu0
    %v107 = vadd.f32 0.0, %v106
    %v108 = vpop.f32.mrb[0].mxu0
    %109 = vdwg.mxu0
    %v110 = vmul.f32 %v102, 0.5
    %v111 = vmul.f32 %v107, 0.5
    %v112 = vmul.f32 %v102, %v102
    %v113 = vmul.f32 %v107, %v107
    %v114 = vmul.f32 %v112, %v102
    %v115 = vmul.f32 %v113, %v107
    %v116 = vmul.f32 %v114, 0.044715
    %v117 = vmul.f32 %v115, 0.044715
    %v118 = vadd.f32 %v102, %v116
    %v119 = vadd.f32 %v107, %v117
    %v120 = vmul.f32 %v118, 0.7978846
    %v121 = vmul.f32 %v119, 0.7978846
    %v122 = vtanh.pop %v120
    %v123 = vtanh.pop %v121
    %v124 = vadd.f32 %v122, 1.0
    %v125 = vadd.f32 %v123, 1.0
    %v126 = vmul.f32 %v110, %v124
    %v127 = vmul.f32 %v111, %v125
    %130 = vrot.lane.b32.xlu0 %v102, 64
    %v131 = vpop.permute.xlu0 %130
    %132 = vrot.lane.b32.xlu0 %v107, 64
    %v133 = vpop.permute.xlu0 %132
    %v136 = vmul.f32 %v126, %v131
    %v137 = vmul.f32 %v127, %v133
    %v138 = vld [vmem:[#allocation2] sm:$0xff]
    %v139 = vld [vmem:[#allocation2 + $0x8] sm:$0xff]
    %v140 = vld [vmem:[%s2] sm:$0xff]
    %v141 = vld [vmem:[%s2 + $0x8] sm:$0xff]
    %v142 = vld [vmem:[%s2 + $0x10] sm:$0xff]
    %v143 = vld [vmem:[%s2 + $0x18] sm:$0xff]
    %v144 = vld [vmem:[%s2 + $0x20] sm:$0xff]
    %v145 = vld [vmem:[%s2 + $0x28] sm:$0xff]
    %v146 = vld [vmem:[%s2 + $0x30] sm:$0xff]
    %v147 = vld [vmem:[%s2 + $0x38] sm:$0xff]
    %vm148 = vcmask 523264
    %v150 = vsel %vm148, %v136, 0
    %v153 = vsel %vm148, %v137, 0
    %155 = vmatprep.subr.mxu0 0.0
    %156 = vmatpush1.msra.mxu0 %v140
    %157 = vmatprep.subr.mxu0 0.0
    %158 = vmatpush1.msra.mxu0 %v141
    %159 = vmatprep.subr.mxu0 0.0
    %160 = vmatpush1.msra.mxu0 %v142
    %161 = vmatprep.subr.mxu0 0.0
    %162 = vmatpush1.msra.mxu0 %v143
    %163 = vmatprep.subr.mxu0 0.0
    %164 = vmatpush1.msra.mxu0 %v144
    %165 = vmatprep.subr.mxu0 0.0
    %166 = vmatpush1.msra.mxu0 %v145
    %167 = vmatprep.subr.mxu0 0.0
    %168 = vmatpush1.msra.mxu0 %v146
    %169 = vmatprep.subr.mxu0 0.0
    %170 = vmatpush1.msra.mxu0 %v147
    %171 = vmatprep.subr.mxu0 0.0
    %172 = vmatpush1.msra.mxu0 0.0
    %173 = vmatprep.subr.mxu0 0.0
    %174 = vmatpush1.msra.mxu0 0.0
    %175 = vmatprep.subr.mxu0 0.0
    %176 = vmatpush1.msra.mxu0 0.0
    %177 = vmatprep.subr.mxu0 0.0
    %178 = vmatpush1.msra.mxu0 0.0
    %179 = vmatprep.subr.mxu0 0.0
    %180 = vmatpush1.msra.mxu0 0.0
    %181 = vmatprep.subr.mxu0 0.0
    %182 = vmatpush1.msra.mxu0 0.0
    %183 = vmatprep.subr.mxu0 0.0
    %184 = vmatpush1.msra.mxu0 0.0
    %185 = vmatprep.subr.mxu0 0.0
    %186 = vmatpush1.msra.mxu0 0.0
    %187 = vmatprep.subr.mxu0 0.0
    %188 = vmatpush1.msra.mxu0 0.0
    %189 = vmatprep.subr.mxu0 0.0
    %190 = vmatpush1.msra.mxu0 0.0
    %191 = vmatprep.subr.mxu0 0.0
    %192 = vmatpush1.msra.mxu0 0.0
    %193 = vmatprep.subr.mxu0 0.0
    %194 = vmatpush1.msra.mxu0 0.0
    %195 = vmatprep.subr.mxu0 0.0
    %196 = vmatpush1.msra.mxu0 0.0
    %197 = vmatprep.subr.mxu0 0.0
    %198 = vmatpush1.msra.mxu0 0.0
    %199 = vmatprep.subr.mxu0 0.0
    %200 = vmatpush1.msra.mxu0 0.0
    %201 = vmatprep.subr.mxu0 0.0
    %202 = vmatpush1.msra.mxu0 0.0
    %203 = vmatprep.subr.mxu0 0.0
    %204 = vmatpush1.msra.mxu0 0.0
    %205 = vmatprep.subr.mxu0 0.0
    %206 = vmatpush1.msra.mxu0 0.0
    %207 = vmatprep.subr.mxu0 0.0
    %208 = vmatpush1.msra.mxu0 0.0
    %209 = vmatprep.subr.mxu0 0.0
    %210 = vmatpush1.msra.mxu0 0.0
    %211 = vmatprep.subr.mxu0 0.0
    %212 = vmatpush1.msra.mxu0 0.0
    %213 = vmatprep.subr.mxu0 0.0
    %214 = vmatpush1.msra.mxu0 0.0
    %215 = vmatprep.subr.mxu0 0.0
    %216 = vmatpush1.msra.mxu0 0.0
    %217 = vmatprep.subr.mxu0 0.0
    %218 = vmatpush1.msra.mxu0 0.0
    %219 = vmatprep.mubr.f32.mxu0 0.0
    %220 = vmatmul.mubr.f32.gmra.mrb[0].mxu0 %v150
    %v221 = vpop.f32.mrb[0].mxu0
    %v222 = vadd.f32 0.0, %v221
    %v223 = vpop.f32.mrb[0].mxu0
    %224 = vmatprep.mubr.f32.mxu0 0.0
    %225 = vmatmul.mubr.f32.gmra.mrb[0].mxu0 %v153
    %v226 = vpop.f32.mrb[0].mxu0
    %v227 = vadd.f32 0.0, %v226
    %v228 = vpop.f32.mrb[0].mxu0
    %229 = vdwg.mxu0
    %v230 = vadd.f32 %v138, %v222
    %v231 = vadd.f32 %v139, %v227
    %232 = vst.msk [vmem:[#allocation2] sm:$0xff] %vm28, %v230
    %233 = vst.msk [vmem:[#allocation2 + $0x8] sm:$0xff] %vm28, %v231
    // Predicated region
    $region18: #{tpu_custom_call.1} parent=1 // pred_check
      %p234 = pneg %p15
    $region19: #{tpu_custom_call.1} parent=1 // pred_check_branch
      %236 = sbr.rel (%p234) target = $region21
    $region20: #{tpu_custom_call.1} parent=1 // pred_region
      %v237 = vld [vmem:[#allocation2] sm:$0xff]
      %v238 = vld [vmem:[#allocation2 + $0x8] sm:$0xff]
      %239 = vst.msk [vmem:[#allocation3] sm:$0xff] %vm28, %v237
      %240 = vst.msk [vmem:[#allocation3 + $0x8] sm:$0xff] %vm28, %v238
    $region21: #{tpu_custom_call.1} parent=1 // pred_fallthru
      _
    // Predicated region
    $region22: #{tpu_custom_call.1} parent=1 // pred_check
      _
    $region23: #{tpu_custom_call.1} parent=1 // pred_check_branch
      %242 = sbr.rel (0) target = $region25
    $region24: #{tpu_custom_call.1} parent=1 // pred_region
      %s244 = ssub.s32 256, 256
      %245 = vsyncadd [#allocation4], %s244
      %s246 = sshll.u32 [#allocation3], 4
      %s247 = int_to_ptr.vmem [resolvable:$true] %s246
      %252 = dma.vmem_to_hbm [thread:$0]  %s247, 256, %s3, [#allocation4], 128, 128, 8
    $region25: #{tpu_custom_call.1} parent=1 // pred_fallthru
      _
    // Predicated region
    $region26: #{tpu_custom_call.1} parent=1 // pred_check
      _
    $region27: #{tpu_custom_call.1} parent=1 // pred_check_branch
      %254 = sbr.rel (0) target = $region29
    $region28: #{tpu_custom_call.1} parent=1 // pred_region
      %255 = dma.done [#allocation4], 256
    $region29: #{tpu_custom_call.1} parent=1 // pred_fallthru
      _
    %256 = vsyncpa [#allocation4], 1

</llo_original>
